<compile_context>
chip_gen: v6e
topology: v6e:2x2x1
jax: 0.10.0
libtpu: 0.0.40
codegen_flags: <defaults>
</compile_context>

<pallas_src>
import jax
import jax.numpy as jnp
from jax.experimental import pallas as pl
from jax.experimental.pallas import tpu as pltpu


def _round_up(v, m):
    return ((v + m - 1) // m) * m


def _choose_block_nc(nc, per_vol_bytes, budget_bytes, min_steps=2):
    """Largest divisor of `nc` whose (double-buffered in+out) footprint fits
    the budget while keeping at least `min_steps` grid steps (feeds both v7x
    TensorCores)."""
    target_steps = min(min_steps, nc)
    best = 1
    for b in range(1, nc + 1):
        if nc % b != 0:
            continue
        if b * per_vol_bytes <= budget_bytes and (nc // b) >= target_steps:
            best = b
    return best


def _make_pad_kernel(p):
    def pad_kernel(x_ref, o_ref):
        # x_ref: (B, D, H, W) block of NC-flattened volumes
        # o_ref: (B, D+2p, H+2p, W+2p)
        x = x_ref[...]
        B, D, H, W = x.shape
        Wo = W + 2 * p
        Ho = H + 2 * p

        # circular wrap along W (lane dim): 2*p extra columns
        xw = jnp.concatenate([x[..., W - p:], x, x[..., :p]], axis=-1)

        # zero padding of H (sublane axis) and D (major axis), assembled once
        # so the output block is written with a single full store.
        zh = jnp.zeros((B, D, p, Wo), dtype=x.dtype)
        xh = jnp.concatenate([zh, xw, zh], axis=2)          # (B, D, Ho, Wo)
        zd = jnp.zeros((B, p, Ho, Wo), dtype=x.dtype)
        o_ref[...] = jnp.concatenate([zd, xh, zd], axis=1)  # (B, Do, Ho, Wo)

    return pad_kernel


def custom_pad3d(x, padding_type="Cons", kern_size=3):
    """Pallas implementation of CustomPad3d.forward for NCDHW input."""
    if padding_type != "Cons":
        raise RuntimeError("ERROR - NO Padding style given!!!")
    p = int((kern_size - 1) / 2)
    if p == 0:
        # nothing to pad — skip the kernel entirely
        return x

    N, C, D, H, W = x.shape
    Do, Ho, Wo = D + 2 * p, H + 2 * p, W + 2 * p
    NC = N * C

    # free, row-major reshape: one grid axis over all (n, c) volumes
    x2 = x.reshape(NC, D, H, W)

    # Per-volume VMEM footprint (last two dims padded to (8, 128) tiles),
    # double-buffered input + output.
    itemsize = jnp.dtype(x.dtype).itemsize
    in_vol = D * _round_up(H, 8) * _round_up(W, 128) * itemsize
    out_vol = Do * _round_up(Ho, 8) * _round_up(Wo, 128) * itemsize
    per_vol = 2 * (in_vol + out_vol)

    budget = 4 * 1024 * 1024  # block budget (double-buffered), safe on v5e/v6e/v7x
    B = _choose_block_nc(NC, per_vol, budget, min_steps=2)
    grid = (NC // B,)

    vmem_limit = int(min(max(B * per_vol + (2 << 20), 16 << 20), 64 << 20))

    out = pl.pallas_call(
        _make_pad_kernel(p),
        out_shape=jax.ShapeDtypeStruct((NC, Do, Ho, Wo), x.dtype),
        grid=grid,
        in_specs=[pl.BlockSpec((B, D, H, W), lambda i: (i, 0, 0, 0))],
        out_specs=pl.BlockSpec((B, Do, Ho, Wo), lambda i: (i, 0, 0, 0)),
        compiler_params=pltpu.CompilerParams(
            dimension_semantics=("parallel",),
            vmem_limit_bytes=vmem_limit,
        ),
    )(x2)

    # free reshape back to NCDHW
    return out.reshape(N, C, Do, Ho, Wo)


def custom_pad3d_ref(x, kern_size=3):
    """Pure-JAX reference mirroring the PyTorch forward."""
    p = int((kern_size - 1) / 2)
    if p > 0:
        x = jnp.concatenate([x[..., -p:], x, x[..., :p]], axis=-1)  # circular W
    return jnp.pad(x, ((0, 0), (0, 0), (p, p), (p, p), (0, 0)), mode="constant")


if __name__ == "__main__":
    key = jax.random.PRNGKey(0)
    # small NCDHW input: batch=2, channels=3, depth=4, height=8, width=16
    N, C, D, H, W = 2, 3, 4, 8, 16
    x = jax.random.normal(key, (N, C, D, H, W), dtype=jnp.float32)

    # kern_size=3 -> p=1
    out = jax.block_until_ready(custom_pad3d(x, "Cons", kern_size=3))
    ref = custom_pad3d_ref(x, kern_size=3)
    assert out.shape == ref.shape, (out.shape, ref.shape)
    assert jnp.allclose(out, ref), "Pallas output mismatch vs reference (k=3)"

    # kern_size=5 -> p=2 (wider wrap / pads)
    out5 = jax.block_until_ready(custom_pad3d(x, "Cons", kern_size=5))
    ref5 = custom_pad3d_ref(x, kern_size=5)
    assert out5.shape == ref5.shape, (out5.shape, ref5.shape)
    assert jnp.allclose(out5, ref5), "Pallas output mismatch vs reference (k=5)"

    # kern_size=1 -> p=0 early-out (no kernel launch)
    out1 = jax.block_until_ready(custom_pad3d(x, "Cons", kern_size=1))
    assert out1.shape == x.shape and jnp.allclose(out1, x)

    print("KERNEL_OK")
</pallas_src>

<mosaic_0001>
module attributes {stable_mosaic.version = 11 : i64} {
  func.func @pad_kernel(%arg0: i32, %arg1: memref<3x4x8x16xf32, #tpu.memory_space<vmem>>, %arg2: memref<3x6x10x18xf32, #tpu.memory_space<vmem>>) attributes {dimension_semantics = [#tpu.dimension_semantics<parallel>], iteration_bounds = array<i64: 2>, scalar_prefetch = 0 : i64, scratch_operands = 0 : i64, tpu.core_type = #tpu.core_type<tc>, window_params = [{transform_indices = @transform_0, window_bounds = array<i64: 3, 4, 8, 16>}, {transform_indices = @transform_1, window_bounds = array<i64: 3, 6, 10, 18>}]} {
    %c0 = arith.constant 0 : index
    %c0_0 = arith.constant 0 : index
    %c0_1 = arith.constant 0 : index
    %c0_2 = arith.constant 0 : index
    %0 = vector.load %arg1[%c0, %c0_0, %c0_1, %c0_2] : memref<3x4x8x16xf32, #tpu.memory_space<vmem>>, vector<3x4x8x16xf32>
    %1 = vector.extract_strided_slice %0 {offsets = [0, 0, 0, 15], sizes = [3, 4, 8, 1], strides = [1, 1, 1, 1]} : vector<3x4x8x16xf32> to vector<3x4x8x1xf32>
    %2 = vector.extract_strided_slice %0 {offsets = [0, 0, 0, 0], sizes = [3, 4, 8, 1], strides = [1, 1, 1, 1]} : vector<3x4x8x16xf32> to vector<3x4x8x1xf32>
    %3 = tpu.concatenate %1, %0, %2 in 3 : vector<3x4x8x1xf32>, vector<3x4x8x16xf32>, vector<3x4x8x1xf32> -> vector<3x4x8x18xf32>
    %cst = arith.constant 0.000000e+00 : f32
    %4 = vector.broadcast %cst : f32 to vector<3x4x1x18xf32>
    %5 = tpu.concatenate %4, %3, %4 in 2 : vector<3x4x1x18xf32>, vector<3x4x8x18xf32>, vector<3x4x1x18xf32> -> vector<3x4x10x18xf32>
    %cst_3 = arith.constant 0.000000e+00 : f32
    %6 = vector.broadcast %cst_3 : f32 to vector<3x1x10x18xf32>
    %7 = tpu.concatenate %6, %5, %6 in 1 : vector<3x1x10x18xf32>, vector<3x4x10x18xf32>, vector<3x1x10x18xf32> -> vector<3x6x10x18xf32>
    %c0_4 = arith.constant 0 : index
    %c0_5 = arith.constant 0 : index
    %c0_6 = arith.constant 0 : index
    %c0_7 = arith.constant 0 : index
    %8 = vector.load %arg2[%c0_4, %c0_5, %c0_6, %c0_7] : memref<3x6x10x18xf32, #tpu.memory_space<vmem>>, vector<3x6x10x18xf32>
    tpu.vector_store %arg2[%c0_4, %c0_5, %c0_6, %c0_7], %7 {strides = array<i32>} : memref<3x6x10x18xf32, #tpu.memory_space<vmem>>, vector<3x6x10x18xf32>,
    return
  }
  func.func @transform_0(%arg0: i32) -> (i32, i32, i32, i32) {
    %c0_i32 = arith.constant 0 : i32
    %c0_i32_0 = arith.constant 0 : i32
    %c0_i32_1 = arith.constant 0 : i32
    %c0_i32_2 = arith.constant 0 : i32
    return %arg0, %c0_i32, %c0_i32_0, %c0_i32_1 : i32, i32, i32, i32
  }
  func.func @transform_1(%arg0: i32) -> (i32, i32, i32, i32) {
    %c0_i32 = arith.constant 0 : i32
    %c0_i32_0 = arith.constant 0 : i32
    %c0_i32_1 = arith.constant 0 : i32
    %c0_i32_2 = arith.constant 0 : i32
    return %arg0, %c0_i32, %c0_i32_0, %c0_i32_1 : i32, i32, i32, i32
  }
}

</mosaic_0001>

<llo_original>
// kernel: tpu_custom_call.1
$region0: #{tpu_custom_call.1}
  #allocation0 [shape = 'u32[]', space=smem, size = 0x4, offset = 0x4, fixed_abs, tag = 'smem constant byte address 0x4 - core index']
  #allocation1 [shape = 'u32[144,128]{1,0:T(1,128)}', space=vmem, size = 0x12000, scoped, tag = 'internal scratch']
  %s0 = inlined_call_operand.hbm [shape: f32[6,4,8,16], index: 0, kind: input, shape index: {}]
  %s1 = inlined_call_operand.vmem [shape: f32[6,6,10,18], index: 1, kind: output, shape index: {}]
  %s2 = sld [smem:[#allocation0]]
  $region41: #{tpu_custom_call.1} parent=0
    _
  %s4 = ssub.s32 1, %s2
  %s5 = scalar_select 0, %s4, %s2
  $region1: #{tpu_custom_call.1} parent=0
    #allocation2 [shape = 'u8[98304]{0}', space=vmem, size = 0x18000, scoped, tag = 'input window, operand 0']
    #allocation3 [shape = 's32[2]{0}', space=sflag, size = 0x8, scoped, tag = 'scoped memory for tpu_custom_call.1']
    %6 = vsyncpa [#allocation3], 0
    %s7 = scalar_lea.sflag [#allocation3], 1
    %8 = vsyncpa %s7, 0
    loop: start=0, step=1, limit=4
    $region2: #{tpu_custom_call.1} parent=1 // loop_pre_header
      _
    $region3: #{tpu_custom_call.1} parent=1 // loop_header
      %s10 = sphi 0, %s14
      %p11 = scmp.ge.s32.totalorder %s10, 4
      %s20 = sphi 0, %s22
      %s23 = sphi 0, %s20
      %s24 = sphi 0, %s23
      %s40 = sphi 0, %s24
      %s46 = sphi 0, %s48
      %s49 = sphi 0, %s46
      %s50 = sphi 0, %s49
      %s66 = sphi 0, %s50
    $region4: #{tpu_custom_call.1} parent=1 // loop_header_branch
      %13 = sbr.rel (%p11) target = $region8
    $region5: #{tpu_custom_call.1} parent=1 // loop_body
      %s15 = ssub.s32 %s10, 1
      %s16 = ssub.s32 %s10, 2
      %s17 = sadd.s32 %s10, 1
      %s18 = ssub.s32 %s10, %s17
      %p19 = scmp.eq.s32.totalorder %s18, 0
      %s21 = sadd.s32 %s20, 1
      %s22 = scalar_select %p19, %s20, %s21
      %p25 = pneg %p19
      %p26 = scmp.eq.s32.totalorder %s10, 1
      %p27 = por %p25, %p26
      %p28 = scmp.ne.s32.totalorder %s20, %s23
      %p29 = scmp.eq.s32.totalorder %s10, 0
      %p30 = por %p28, %p29
      %p31 = scmp.ne.s32.totalorder %s20, %s23
      %p32 = scmp.eq.s32.totalorder %s15, 1
      %p33 = por %p31, %p32
      %p34 = scmp.ne.s32.totalorder %s23, %s24
      %p35 = scmp.eq.s32.totalorder %s15, 0
      %p36 = por %p34, %p35
      %p37 = scmp.ne.s32.totalorder %s23, %s24
      %p38 = scmp.eq.s32.totalorder %s16, 1
      %p39 = por %p37, %p38
      %p41 = scmp.ne.s32.totalorder %s24, %s40
      %p42 = scmp.eq.s32.totalorder %s16, 0
      %p43 = por %p41, %p42
      %s44 = ssub.s32 %s10, %s17
      %p45 = scmp.eq.s32.totalorder %s44, 0
      %s47 = sadd.s32 %s46, 1
      %s48 = scalar_select %p45, %s46, %s47
      %p51 = pneg %p45
      %p52 = scmp.eq.s32.totalorder %s10, 1
      %p53 = por %p51, %p52
      %p54 = scmp.ne.s32.totalorder %s46, %s49
      %p55 = scmp.eq.s32.totalorder %s10, 0
      %p56 = por %p54, %p55
      %p57 = scmp.ne.s32.totalorder %s46, %s49
      %p58 = scmp.eq.s32.totalorder %s15, 1
      %p59 = por %p57, %p58
      %p60 = scmp.ne.s32.totalorder %s49, %s50
      %p61 = scmp.eq.s32.totalorder %s15, 0
      %p62 = por %p60, %p61
      %p63 = scmp.ne.s32.totalorder %s49, %s50
      %p64 = scmp.eq.s32.totalorder %s16, 1
      %p65 = por %p63, %p64
      %p67 = scmp.ne.s32.totalorder %s50, %s66
      %p68 = scmp.eq.s32.totalorder %s16, 0
      %p69 = por %p67, %p68
      %p70 = scmp.le.s32.totalorder 1, %s10
      %p71 = scmp.lt.s32.totalorder %s10, 3
      %p72 = pnand %p70, %p71
      %p73 = pneg %p72
      // Predicated region
      $region9: #{tpu_custom_call.1} parent=5 // pred_check
        _
      $region10: #{tpu_custom_call.1} parent=5 // pred_check_branch
        %75 = sbr.rel (%p72) target = $region12
      $region11: #{tpu_custom_call.1} parent=5 // pred_region
        %s76 = ssub.s32 %s10, 1
      $region12: #{tpu_custom_call.1} parent=5 // pred_fallthru
        _
      %p77 = scmp.lt.s32.totalorder %s10, 2
      // Predicated region
      $region13: #{tpu_custom_call.1} parent=5 // pred_check
        %p78 = pneg %p77
      $region14: #{tpu_custom_call.1} parent=5 // pred_check_branch
        %80 = sbr.rel (%p78) target = $region16
      $region15: #{tpu_custom_call.1} parent=5 // pred_region
        // Predicated region
        $region17: #{tpu_custom_call.1} parent=15 // pred_check
          %p81 = pneg %p30
        $region18: #{tpu_custom_call.1} parent=15 // pred_check_branch
          %83 = sbr.rel (%p81) target = $region20
        $region19: #{tpu_custom_call.1} parent=15 // pred_region
          %s84 = sand.u32 %s20, 1
          %s85 = scalar_lea.sflag [#allocation3], %s84
          %s86 = sand.u32 %s20, 1
          %s87 = smul.addr %s86, 96
          %s88 = scalar_lea.vmem [#allocation2], %s87
          %s89 = smul.u32 3, %s10
          %s91 = ssub.s32 1536, 1536
          %92 = vsyncadd %s85, %s91
          %s93 = smul.addr %s89, 4
          %s94 = smul.addr %s93, 128
          %s95 = scalar_lea.hbm %s0, %s94
          %s96 = sshll.u32 %s88, 4
          %s97 = int_to_ptr.vmem [resolvable:$true] %s96
          %102 = dma.hbm_to_vmem [thread:$0]  %s95, 1536, %s97, %s85, 128, 128, 8
        $region20: #{tpu_custom_call.1} parent=15 // pred_fallthru
          _
      $region16: #{tpu_custom_call.1} parent=5 // pred_fallthru
        _
      %p103 = scmp.le.s32.totalorder 1, %s10
      %p104 = scmp.lt.s32.totalorder %s10, 3
      %p105 = pnand %p103, %p104
      %p106 = pneg %p105
      // Predicated region
      $region21: #{tpu_custom_call.1} parent=5 // pred_check
        _
      $region22: #{tpu_custom_call.1} parent=5 // pred_check_branch
        %108 = sbr.rel (%p105) target = $region24
      $region23: #{tpu_custom_call.1} parent=5 // pred_region
        %s109 = ssub.s32 %s10, 1
        %s110 = sand.u32 %s23, 1
        %s111 = scalar_lea.sflag [#allocation3], %s110
        %s112 = sand.u32 %s23, 1
        %s113 = smul.addr %s112, 96
        %s114 = scalar_lea.vmem [#allocation2], %s113
        // Predicated region
        $region25: #{tpu_custom_call.1} parent=23 // pred_check
          %p115 = pneg %p36
        $region26: #{tpu_custom_call.1} parent=23 // pred_check_branch
          %117 = sbr.rel (%p115) target = $region28
        $region27: #{tpu_custom_call.1} parent=23 // pred_region
          %118 = dma.done %s111, 1536
        $region28: #{tpu_custom_call.1} parent=23 // pred_fallthru
          _
        %s119 = sand.u32 %s23, 1
        %s120 = scalar_lea.sflag [#allocation3], %s119
        %s121 = sand.u32 %s23, 1
        %s122 = smul.addr %s121, 96
        %s123 = scalar_lea.vmem [#allocation2], %s122
        %p124 = pneg %p36
        %p125 = pneg %p33
        %p126 = pneg %p62
        %p127 = pneg %p59
        %s128 = smul.u32 3, %s15
        %p129 = scmp.lt.s32.totalorder %s128, 5
        %s130 = scalar_select %p129, %s128, 5
        %s131 = smul.addr %s130, 12
        %s132 = smul.addr %s131, 8
        %s133 = scalar_lea.vmem %s1, %s132
        %s134 = smul.u32 3, %s15
        %s135 = smul.u32 3, %s15
        %p136 = scmp.lt.s32.totalorder %s135, 5
        %s137 = scalar_select %p136, %s135, 5
        %s138 = smul.addr %s137, 12
        %s139 = smul.addr %s138, 8
        %s140 = scalar_lea.vmem %s1, %s139
        %s141 = smul.u32 3, %s15
        %v142 = vld [vmem:[%s114] sm:$0xff]
        %v143 = vld [vmem:[%s114 + $0x8] sm:$0xff]
        %v144 = vld [vmem:[%s114 + $0x10] sm:$0xff]
        %v145 = vld [vmem:[%s114 + $0x18] sm:$0xff]
        %v146 = vld [vmem:[%s114 + $0x20] sm:$0xff]
        %v147 = vld [vmem:[%s114 + $0x28] sm:$0xff]
        %v148 = vld [vmem:[%s114 + $0x30] sm:$0xff]
        %v149 = vld [vmem:[%s114 + $0x38] sm:$0xff]
        %v150 = vld [vmem:[%s114 + $0x40] sm:$0xff]
        %v151 = vld [vmem:[%s114 + $0x48] sm:$0xff]
        %v152 = vld [vmem:[%s114 + $0x50] sm:$0xff]
        %v153 = vld [vmem:[%s114 + $0x58] sm:$0xff]
        %166 = vrot.lane.b32.xlu0 %v142, 113
        %v167 = vpop.permute.xlu0 %166
        %168 = vrot.lane.b32.xlu0 %v143, 113
        %v169 = vpop.permute.xlu0 %168
        %170 = vrot.lane.b32.xlu0 %v144, 113
        %v171 = vpop.permute.xlu0 %170
        %172 = vrot.lane.b32.xlu0 %v145, 113
        %v173 = vpop.permute.xlu0 %172
        %174 = vrot.lane.b32.xlu0 %v146, 113
        %v175 = vpop.permute.xlu0 %174
        %176 = vrot.lane.b32.xlu0 %v147, 113
        %v177 = vpop.permute.xlu0 %176
        %178 = vrot.lane.b32.xlu0 %v148, 113
        %v179 = vpop.permute.xlu0 %178
        %180 = vrot.lane.b32.xlu0 %v149, 113
        %v181 = vpop.permute.xlu0 %180
        %182 = vrot.lane.b32.xlu0 %v150, 113
        %v183 = vpop.permute.xlu0 %182
        %184 = vrot.lane.b32.xlu0 %v151, 113
        %v185 = vpop.permute.xlu0 %184
        %186 = vrot.lane.b32.xlu0 %v152, 113
        %v187 = vpop.permute.xlu0 %186
        %188 = vrot.lane.b32.xlu0 %v153, 113
        %v189 = vpop.permute.xlu0 %188
        %202 = vrot.lane.b32.xlu0 %v142, 1
        %v203 = vpop.permute.xlu0 %202
        %204 = vrot.lane.b32.xlu0 %v143, 1
        %v205 = vpop.permute.xlu0 %204
        %206 = vrot.lane.b32.xlu0 %v144, 1
        %v207 = vpop.permute.xlu0 %206
        %208 = vrot.lane.b32.xlu0 %v145, 1
        %v209 = vpop.permute.xlu0 %208
        %210 = vrot.lane.b32.xlu0 %v146, 1
        %v211 = vpop.permute.xlu0 %210
        %212 = vrot.lane.b32.xlu0 %v147, 1
        %v213 = vpop.permute.xlu0 %212
        %214 = vrot.lane.b32.xlu0 %v148, 1
        %v215 = vpop.permute.xlu0 %214
        %216 = vrot.lane.b32.xlu0 %v149, 1
        %v217 = vpop.permute.xlu0 %216
        %218 = vrot.lane.b32.xlu0 %v150, 1
        %v219 = vpop.permute.xlu0 %218
        %220 = vrot.lane.b32.xlu0 %v151, 1
        %v221 = vpop.permute.xlu0 %220
        %222 = vrot.lane.b32.xlu0 %v152, 1
        %v223 = vpop.permute.xlu0 %222
        %224 = vrot.lane.b32.xlu0 %v153, 1
        %v225 = vpop.permute.xlu0 %224
        %238 = vrot.lane.b32.xlu0 %v142, 17
        %v239 = vpop.permute.xlu0 %238
        %240 = vrot.lane.b32.xlu0 %v143, 17
        %v241 = vpop.permute.xlu0 %240
        %242 = vrot.lane.b32.xlu0 %v144, 17
        %v243 = vpop.permute.xlu0 %242
        %244 = vrot.lane.b32.xlu0 %v145, 17
        %v245 = vpop.permute.xlu0 %244
        %246 = vrot.lane.b32.xlu0 %v146, 17
        %v247 = vpop.permute.xlu0 %246
        %248 = vrot.lane.b32.xlu0 %v147, 17
        %v249 = vpop.permute.xlu0 %248
        %250 = vrot.lane.b32.xlu0 %v148, 17
        %v251 = vpop.permute.xlu0 %250
        %252 = vrot.lane.b32.xlu0 %v149, 17
        %v253 = vpop.permute.xlu0 %252
        %254 = vrot.lane.b32.xlu0 %v150, 17
        %v255 = vpop.permute.xlu0 %254
        %256 = vrot.lane.b32.xlu0 %v151, 17
        %v257 = vpop.permute.xlu0 %256
        %258 = vrot.lane.b32.xlu0 %v152, 17
        %v259 = vpop.permute.xlu0 %258
        %260 = vrot.lane.b32.xlu0 %v153, 17
        %v261 = vpop.permute.xlu0 %260
        %vm274 = vcmask 7168
        %v275 = vsel %vm274, %v167, %v203
        %v276 = vsel %vm274, %v169, %v205
        %v277 = vsel %vm274, %v171, %v207
        %v278 = vsel %vm274, %v173, %v209
        %v279 = vsel %vm274, %v175, %v211
        %v280 = vsel %vm274, %v177, %v213
        %v281 = vsel %vm274, %v179, %v215
        %v282 = vsel %vm274, %v181, %v217
        %v283 = vsel %vm274, %v183, %v219
        %v284 = vsel %vm274, %v185, %v221
        %v285 = vsel %vm274, %v187, %v223
        %v286 = vsel %vm274, %v189, %v225
        %vm287 = vcmask 138240
        %v288 = vsel %vm287, %v275, %v239
        %v289 = vsel %vm287, %v276, %v241
        %v290 = vsel %vm287, %v277, %v243
        %v291 = vsel %vm287, %v278, %v245
        %v292 = vsel %vm287, %v279, %v247
        %v293 = vsel %vm287, %v280, %v249
        %v294 = vsel %vm287, %v281, %v251
        %v295 = vsel %vm287, %v282, %v253
        %v296 = vsel %vm287, %v283, %v255
        %v297 = vsel %vm287, %v284, %v257
        %v298 = vsel %vm287, %v285, %v259
        %v299 = vsel %vm287, %v286, %v261
        %v312 = vrot.slane %v288, 7
        %v313 = vrot.slane %v289, 7
        %v314 = vrot.slane %v290, 7
        %v315 = vrot.slane %v291, 7
        %v316 = vrot.slane %v292, 7
        %v317 = vrot.slane %v293, 7
        %v318 = vrot.slane %v294, 7
        %v319 = vrot.slane %v295, 7
        %v320 = vrot.slane %v296, 7
        %v321 = vrot.slane %v297, 7
        %v322 = vrot.slane %v298, 7
        %v323 = vrot.slane %v299, 7
        %vm336 = vcmask 1040384
        %v337 = vsel %vm336, 0.0, %v312
        %v338 = vsel %vm336, 0.0, %v313
        %v339 = vsel %vm336, 0.0, %v314
        %v340 = vsel %vm336, 0.0, %v315
        %v341 = vsel %vm336, 0.0, %v316
        %v342 = vsel %vm336, 0.0, %v317
        %v343 = vsel %vm336, 0.0, %v318
        %v344 = vsel %vm336, 0.0, %v319
        %v345 = vsel %vm336, 0.0, %v320
        %v346 = vsel %vm336, 0.0, %v321
        %v347 = vsel %vm336, 0.0, %v322
        %v348 = vsel %vm336, 0.0, %v323
        %v349 = vsel %vm336, %v312, 0.0
        %v350 = vsel %vm336, %v313, 0.0
        %v351 = vsel %vm336, %v314, 0.0
        %v352 = vsel %vm336, %v315, 0.0
        %v353 = vsel %vm336, %v316, 0.0
        %v354 = vsel %vm336, %v317, 0.0
        %v355 = vsel %vm336, %v318, 0.0
        %v356 = vsel %vm336, %v319, 0.0
        %v357 = vsel %vm336, %v320, 0.0
        %v358 = vsel %vm336, %v321, 0.0
        %v359 = vsel %vm336, %v322, 0.0
        %v360 = vsel %vm336, %v323, 0.0
        %vm361 = vcmask 146432
        %362 = vst.msk [vmem:[%s140] sm:$0xff] %vm361, 0.0
        %vm363 = vcmask 140288
        %364 = vst.msk [vmem:[%s140 + $0x8] sm:$0x3] %vm363, 0.0
        %365 = vst.msk [vmem:[%s140 + $0x10] sm:$0xff] %vm361, %v337
        %366 = vst.msk [vmem:[%s140 + $0x18] sm:$0x3] %vm363, %v349
        %367 = vst.msk [vmem:[%s140 + $0x20] sm:$0xff] %vm361, %v338
        %368 = vst.msk [vmem:[%s140 + $0x28] sm:$0x3] %vm363, %v350
        %369 = vst.msk [vmem:[%s140 + $0x30] sm:$0xff] %vm361, %v339
        %370 = vst.msk [vmem:[%s140 + $0x38] sm:$0x3] %vm363, %v351
        %371 = vst.msk [vmem:[%s140 + $0x40] sm:$0xff] %vm361, %v340
        %372 = vst.msk [vmem:[%s140 + $0x48] sm:$0x3] %vm363, %v352
        %373 = vst.msk [vmem:[%s140 + $0x50] sm:$0xff] %vm361, 0.0
        %374 = vst.msk [vmem:[%s140 + $0x58] sm:$0x3] %vm363, 0.0
        %375 = vst.msk [vmem:[%s140 + $0x60] sm:$0xff] %vm361, 0.0
        %376 = vst.msk [vmem:[%s140 + $0x68] sm:$0x3] %vm363, 0.0
        %377 = vst.msk [vmem:[%s140 + $0x70] sm:$0xff] %vm361, %v341
        %378 = vst.msk [vmem:[%s140 + $0x78] sm:$0x3] %vm363, %v353
        %379 = vst.msk [vmem:[%s140 + $0x80] sm:$0xff] %vm361, %v342
        %380 = vst.msk [vmem:[%s140 + $0x88] sm:$0x3] %vm363, %v354
        %381 = vst.msk [vmem:[%s140 + $0x90] sm:$0xff] %vm361, %v343
        %382 = vst.msk [vmem:[%s140 + $0x98] sm:$0x3] %vm363, %v355
        %383 = vst.msk [vmem:[%s140 + $0xa0] sm:$0xff] %vm361, %v344
        %384 = vst.msk [vmem:[%s140 + $0xa8] sm:$0x3] %vm363, %v356
        %385 = vst.msk [vmem:[%s140 + $0xb0] sm:$0xff] %vm361, 0.0
        %386 = vst.msk [vmem:[%s140 + $0xb8] sm:$0x3] %vm363, 0.0
        %387 = vst.msk [vmem:[%s140 + $0xc0] sm:$0xff] %vm361, 0.0
        %388 = vst.msk [vmem:[%s140 + $0xc8] sm:$0x3] %vm363, 0.0
        %389 = vst.msk [vmem:[%s140 + $0xd0] sm:$0xff] %vm361, %v345
        %390 = vst.msk [vmem:[%s140 + $0xd8] sm:$0x3] %vm363, %v357
        %391 = vst.msk [vmem:[%s140 + $0xe0] sm:$0xff] %vm361, %v346
        %392 = vst.msk [vmem:[%s140 + $0xe8] sm:$0x3] %vm363, %v358
        %393 = vst.msk [vmem:[%s140 + $0xf0] sm:$0xff] %vm361, %v347
        %394 = vst.msk [vmem:[%s140 + $0xf8] sm:$0x3] %vm363, %v359
        %395 = vst.msk [vmem:[%s140 + $0x100] sm:$0xff] %vm361, %v348
        %396 = vst.msk [vmem:[%s140 + $0x108] sm:$0x3] %vm363, %v360
        %397 = vst.msk [vmem:[%s140 + $0x110] sm:$0xff] %vm361, 0.0
        %398 = vst.msk [vmem:[%s140 + $0x118] sm:$0x3] %vm363, 0.0
        %s399 = smul.u32 3, %s15
        %p400 = scmp.lt.s32.totalorder %s399, 5
        %s401 = scalar_select %p400, %s399, 5
        %s402 = smul.addr %s401, 12
        %s403 = smul.addr %s402, 8
        %s404 = scalar_lea.vmem %s1, %s403
        // Predicated region
        $region29: #{tpu_custom_call.1} parent=23 // pred_check
          %p405 = pneg %p59
        $region30: #{tpu_custom_call.1} parent=23 // pred_check_branch
          %407 = sbr.rel (%p405) target = $region32
        $region31: #{tpu_custom_call.1} parent=23 // pred_region
          %s408 = smul.u32 3, %s15
        $region32: #{tpu_custom_call.1} parent=23 // pred_fallthru
          _
      $region24: #{tpu_custom_call.1} parent=5 // pred_fallthru
        _
      %p409 = scmp.le.s32.totalorder 2, %s10
      // Predicated region
      $region33: #{tpu_custom_call.1} parent=5 // pred_check
        %p410 = pneg %p409
      $region34: #{tpu_custom_call.1} parent=5 // pred_check_branch
        %412 = sbr.rel (%p410) target = $region36
      $region35: #{tpu_custom_call.1} parent=5 // pred_region
        %s413 = ssub.s32 %s10, 2
        // Predicated region
        $region37: #{tpu_custom_call.1} parent=35 // pred_check
          %p414 = pneg %p65
        $region38: #{tpu_custom_call.1} parent=35 // pred_check_branch
          %416 = sbr.rel (%p414) target = $region40
        $region39: #{tpu_custom_call.1} parent=35 // pred_region
          %s417 = smul.u32 3, %s16
          %p418 = scmp.lt.s32.totalorder %s417, 5
          %s419 = scalar_select %p418, %s417, 5
          %s420 = smul.addr %s419, 12
          %s421 = smul.addr %s420, 8
          %s422 = scalar_lea.vmem %s1, %s421
        $region40: #{tpu_custom_call.1} parent=35 // pred_fallthru
          _
      $region36: #{tpu_custom_call.1} parent=5 // pred_fallthru
        _
    $region6: #{tpu_custom_call.1} parent=1 // loop_footer
      %s14 = sadd.s32 1, %s10
    $region7: #{tpu_custom_call.1} parent=1 // loop_footer_branch
      %9 = sbr.rel target = $region3
    $region8: #{tpu_custom_call.1} parent=1 // loop_exit
      _
    %423 = vsyncpa [#allocation3], 1
    %s424 = scalar_lea.sflag [#allocation3], 1
    %425 = vsyncpa %s424, 1

</llo_original>
